<compile_context>
chip_gen: v5e
topology: v5e:2x2
jax: 0.10.0
libtpu: 0.0.40
codegen_flags: <defaults>
</compile_context>

<pallas_src>
import functools

import jax
import jax.numpy as jnp
from jax.experimental import pallas as pl
from jax.experimental.pallas import tpu as pltpu

HIDDEN = 15


def value_net_kernel(x_ref, w1_ref, b1_ref, w2_ref, b2_ref, o_ref):
    # x_ref : (TB, D)  native batch-major tile (contiguous in HBM)
    # w1_ref: (H, D)   resident (constant block index)
    # b1_ref: (H, 1)   resident, broadcasts across lanes
    # w2_ref: (H, 1)   resident, broadcasts across lanes
    # b2_ref: (1,)     SMEM scalar
    # o_ref : (1, TB)  lane-dense output
    #
    # On-chip relayout to feature-major (batch -> lanes). XLU work; overlapped
    # with the next tile's x DMA by the BlockSpec pipeline.
    x_t = x_ref[...].T                                    # (D, TB)

    # Layer 1 on the MXU: (H, D) @ (D, TB) -> (H, TB), lane-dense, f32 acc.
    h = jnp.dot(w1_ref[...], x_t, preferred_element_type=jnp.float32)
    h = jnp.maximum(h + b1_ref[...], 0.0)                 # bias + ReLU (VPU)

    # Layer 2 (N=1): VPU multiply + sublane (feature) reduce — keeps the MXU
    # push/pop off the critical path for this layer.
    y = jnp.sum(h * w2_ref[...], axis=0, keepdims=True) + b2_ref[0]   # (1, TB)

    o_ref[...] = y.astype(o_ref.dtype)


def _round_up(n: int, m: int) -> int:
    return ((n + m - 1) // m) * m


@functools.partial(jax.jit, static_argnames=("block_b",))
def value_network_forward(x, w1, b1, w2, b2, *, block_b: int = 16384):
    """Value-network forward pass.

    x : (B, D) float32  (native PyTorch layout — no wrapper transpose needed)
    w1: (15, D) float32 (PyTorch layer1.weight, [out, in])
    b1: (15,)   float32
    w2: (1, 15) float32 (PyTorch layer2.weight)
    b2: (1,)    float32
    Returns (B, 1) float32, equal to ReLU(x @ w1.T + b1) @ w2.T + b2.
    """
    B, D = x.shape
    H = HIDDEN

    x = x.astype(jnp.float32)

    # Lane-align the batch to a multiple of 128. Only copies when B is ragged;
    # for aligned batches x goes to the kernel untouched (zero extra HBM passes).
    b_pad = _round_up(B, 128)
    if b_pad != B:
        x = jnp.pad(x, ((0, b_pad - B), (0, 0)))

    # Batch tile: multiple of 128; aim for >= ~4 grid steps (v7x megacore
    # sharding + pipeline depth) while keeping each tile's x DMA well above the
    # ~0.35 us per-step overhead. Capped by block_b so the lane-padded (tb, D)
    # VMEM blocks (tb * 512 B each, double-buffered) plus temporaries stay
    # inside the 32 MiB scoped-VMEM limit requested below (safe on v5e/v6e/v7x).
    tb = _round_up(pl.cdiv(b_pad, 4), 128)
    tb = max(128, min(tb, block_b, b_pad))
    grid = (pl.cdiv(b_pad, tb),)

    w1_f = w1.astype(jnp.float32)                    # (H, D)
    b1_col = b1.reshape(H, 1).astype(jnp.float32)    # (H, 1)
    w2_col = w2.reshape(H, 1).astype(jnp.float32)    # (H, 1) == layer2 weights as a column
    b2_s = b2.reshape(1).astype(jnp.float32)         # (1,)  SMEM scalar

    cost = pl.CostEstimate(
        flops=2 * b_pad * D * H + 2 * b_pad * H,
        transcendentals=0,
        bytes_accessed=b_pad * D * 4 + b_pad * 4 + (H * D + 2 * H + 1) * 4,
    )

    out = pl.pallas_call(
        value_net_kernel,
        out_shape=jax.ShapeDtypeStruct((1, b_pad), jnp.float32),
        grid=grid,
        in_specs=[
            pl.BlockSpec((tb, D), lambda i: (i, 0)),   # x tile: native layout, streamed
            pl.BlockSpec((H, D), lambda i: (0, 0)),    # w1 (resident)
            pl.BlockSpec((H, 1), lambda i: (0, 0)),    # b1 (resident)
            pl.BlockSpec((H, 1), lambda i: (0, 0)),    # w2 (resident)
            pl.BlockSpec(memory_space=pltpu.SMEM),     # b2 scalar in SMEM
        ],
        out_specs=pl.BlockSpec((1, tb), lambda i: (0, i)),
        compiler_params=pltpu.CompilerParams(
            dimension_semantics=("parallel",),
            vmem_limit_bytes=32 * 1024 * 1024,
        ),
        cost_estimate=cost,
    )(x, w1_f, b1_col, w2_col, b2_s)

    # Back to the PyTorch-facing (B, 1) layout; drop batch padding.
    return out[0, :B].reshape(B, 1)


if __name__ == "__main__":
    # Hopper-v4 with exclude_current_positions_from_observation=False -> 12 obs dims.
    obs_space_dims = 12
    batch = 8
    H = HIDDEN

    key = jax.random.PRNGKey(0)
    kx, k1, k2, k3, k4 = jax.random.split(key, 5)

    # nn.Linear default init: U(-1/sqrt(fan_in), 1/sqrt(fan_in)), PyTorch layouts.
    bound1 = 1.0 / jnp.sqrt(jnp.float32(obs_space_dims))
    bound2 = 1.0 / jnp.sqrt(jnp.float32(H))
    w1 = jax.random.uniform(k1, (H, obs_space_dims), jnp.float32, -bound1, bound1)
    b1 = jax.random.uniform(k2, (H,), jnp.float32, -bound1, bound1)
    w2 = jax.random.uniform(k3, (1, H), jnp.float32, -bound2, bound2)
    b2 = jax.random.uniform(k4, (1,), jnp.float32, -bound2, bound2)

    x = jax.random.normal(kx, (batch, obs_space_dims), jnp.float32)

    out = value_network_forward(x, w1, b1, w2, b2)
    out = jax.block_until_ready(out)

    # Pure-JAX reference: y = ReLU(x @ W1^T + b1) @ W2^T + b2
    ref = jnp.maximum(x @ w1.T + b1, 0.0) @ w2.T + b2
    assert out.shape == (batch, 1)
    assert jnp.allclose(out, ref, atol=1e-5, rtol=1e-5)

    print("KERNEL_OK")
</pallas_src>

<mosaic_0001>
module attributes {stable_mosaic.version = 11 : i64} {
  func.func @value_net_kernel(%arg0: i32, %arg1: memref<128x12xf32, #tpu.memory_space<vmem>>, %arg2: memref<15x12xf32, #tpu.memory_space<vmem>>, %arg3: memref<15x1xf32, #tpu.memory_space<vmem>>, %arg4: memref<15x1xf32, #tpu.memory_space<vmem>>, %arg5: memref<1xf32, #tpu.memory_space<smem>>, %arg6: memref<1x128xf32, #tpu.memory_space<vmem>>) attributes {dimension_semantics = [#tpu.dimension_semantics<parallel>], iteration_bounds = array<i64: 1>, scalar_prefetch = 0 : i64, scratch_operands = 0 : i64, tpu.core_type = #tpu.core_type<tc>, window_params = [{transform_indices = @transform_0, window_bounds = array<i64: 128, 12>}, {pipeline_mode = #tpu.pipeline_mode<synchronous>, transform_indices = @transform_1, window_bounds = array<i64: 15, 12>}, {pipeline_mode = #tpu.pipeline_mode<synchronous>, transform_indices = @transform_2, window_bounds = array<i64: 15, 1>}, {pipeline_mode = #tpu.pipeline_mode<synchronous>, transform_indices = @transform_3, window_bounds = array<i64: 15, 1>}, {transform_indices = @transform_4, window_bounds = array<i64: 1>}, {transform_indices = @transform_5, window_bounds = array<i64: 1, 128>}]} {
    %c0 = arith.constant 0 : index
    %c0_0 = arith.constant 0 : index
    %0 = vector.load %arg1[%c0, %c0_0] : memref<128x12xf32, #tpu.memory_space<vmem>>, vector<128x12xf32>
    %1 = tpu.transpose %0, [1, 0] : vector<128x12xf32> -> vector<12x128xf32>
    %c0_1 = arith.constant 0 : index
    %c0_2 = arith.constant 0 : index
    %2 = vector.load %arg2[%c0_1, %c0_2] : memref<15x12xf32, #tpu.memory_space<vmem>>, vector<15x12xf32>
    %cst = arith.constant dense<0.000000e+00> : vector<15x128xf32>
    %3 = tpu.matmul %2, %1, %cst {dimension_numbers = #tpu.dot_dimension_numbers<[1], [0], [0], [1], [0, 0, 1, 1], [], []>} : vector<15x12xf32>, vector<12x128xf32>, vector<15x128xf32> -> vector<15x128xf32>
    %c0_3 = arith.constant 0 : index
    %c0_4 = arith.constant 0 : index
    %4 = vector.load %arg3[%c0_3, %c0_4] : memref<15x1xf32, #tpu.memory_space<vmem>>, vector<15x1xf32>
    %5 = vector.broadcast %4 : vector<15x1xf32> to vector<15x128xf32>
    %6 = arith.addf %3, %5 : vector<15x128xf32>
    %cst_5 = arith.constant 0.000000e+00 : f32
    %7 = vector.broadcast %cst_5 : f32 to vector<15x128xf32>
    %8 = arith.maximumf %6, %7 : vector<15x128xf32>
    %c0_6 = arith.constant 0 : index
    %c0_7 = arith.constant 0 : index
    %9 = vector.load %arg4[%c0_6, %c0_7] : memref<15x1xf32, #tpu.memory_space<vmem>>, vector<15x1xf32>
    %10 = vector.broadcast %9 : vector<15x1xf32> to vector<15x128xf32>
    %11 = arith.mulf %8, %10 : vector<15x128xf32>
    %cst_8 = arith.constant dense<0.000000e+00> : vector<128xf32>
    %12 = vector.multi_reduction <add>, %11, %cst_8 [0] : vector<15x128xf32> to vector<128xf32>
    %13 = vector.shape_cast %12 : vector<128xf32> to vector<1x128xf32>
    %c0_9 = arith.constant 0 : index
    %14 = memref.load %arg5[%c0_9] : memref<1xf32, #tpu.memory_space<smem>>
    %15 = vector.broadcast %14 : f32 to vector<1x128xf32>
    %16 = arith.addf %13, %15 : vector<1x128xf32>
    %c0_10 = arith.constant 0 : index
    %c0_11 = arith.constant 0 : index
    %17 = vector.load %arg6[%c0_10, %c0_11] : memref<1x128xf32, #tpu.memory_space<vmem>>, vector<1x128xf32>
    tpu.vector_store %arg6[%c0_10, %c0_11], %16 {strides = array<i32>} : memref<1x128xf32, #tpu.memory_space<vmem>>, vector<1x128xf32>,
    return
  }
  func.func @transform_0(%arg0: i32) -> (i32, i32) {
    %c0_i32 = arith.constant 0 : i32
    %c0_i32_0 = arith.constant 0 : i32
    return %arg0, %c0_i32 : i32, i32
  }
  func.func @transform_1(%arg0: i32) -> (i32, i32) {
    %c0_i32 = arith.constant 0 : i32
    %c0_i32_0 = arith.constant 0 : i32
    %c0_i32_1 = arith.constant 0 : i32
    return %c0_i32, %c0_i32_0 : i32, i32
  }
  func.func @transform_2(%arg0: i32) -> (i32, i32) {
    %c0_i32 = arith.constant 0 : i32
    %c0_i32_0 = arith.constant 0 : i32
    %c0_i32_1 = arith.constant 0 : i32
    return %c0_i32, %c0_i32_0 : i32, i32
  }
  func.func @transform_3(%arg0: i32) -> (i32, i32) {
    %c0_i32 = arith.constant 0 : i32
    %c0_i32_0 = arith.constant 0 : i32
    %c0_i32_1 = arith.constant 0 : i32
    return %c0_i32, %c0_i32_0 : i32, i32
  }
  func.func @transform_4(%arg0: i32) -> i32 {
    %c0_i32 = arith.constant 0 : i32
    %c0_i32_0 = arith.constant 0 : i32
    return %c0_i32 : i32
  }
  func.func @transform_5(%arg0: i32) -> (i32, i32) {
    %c0_i32 = arith.constant 0 : i32
    %c0_i32_0 = arith.constant 0 : i32
    return %c0_i32, %arg0 : i32, i32
  }
}

</mosaic_0001>

<llo_original>
// kernel: value_network_forward.1
$region0: #{value_network_forward.1}
  #allocation0 [shape = 'u32[]', space=smem, size = 0x4, offset = 0x4, fixed_abs, tag = 'smem constant byte address 0x4 - core index']
  #allocation1 [shape = 'u32[72,128]{1,0:T(1,128)}', space=vmem, size = 0x9000, scoped, tag = 'internal scratch']
  #allocation2 [shape = 'f32[1]{0:T(128)S(6)}', space=smem, size = 0x200, scoped, tag = 'scoped memory for value_network_forward.1']
  %s0 = inlined_call_operand.vmem [shape: f32[128,12], index: 0, kind: input, shape index: {}]
  %s1 = inlined_call_operand.vmem [shape: f32[15,12], index: 1, kind: input, shape index: {}]
  %s2 = inlined_call_operand.vmem [shape: f32[15,1], index: 2, kind: input, shape index: {}]
  %s3 = inlined_call_operand.vmem [shape: f32[15,1], index: 3, kind: input, shape index: {}]
  %s4 = inlined_call_operand.<no memory space> [shape: f32[1], index: 4, kind: input, shape index: {}]
  %s5 = inlined_call_operand.vmem [shape: f32[1,128], index: 5, kind: output, shape index: {}]
  %s6 = sld [smem:[#allocation0]]
  $region30: #{value_network_forward.1} parent=0
    _
  %s8 = ssub.s32 1, %s6
  %s9 = scalar_select 0, %s8, %s6
  %10 = sst [smem:[#allocation2]] %s4
  // Predicated region
  $region2: #{value_network_forward.1} parent=0 // pred_check
    _
  $region3: #{value_network_forward.1} parent=0 // pred_check_branch
    %12 = sbr.rel (0) target = $region5
  $region4: #{value_network_forward.1} parent=0 // pred_region
    _
  $region5: #{value_network_forward.1} parent=0 // pred_fallthru
    _
  // Predicated region
  $region6: #{value_network_forward.1} parent=0 // pred_check
    _
  $region7: #{value_network_forward.1} parent=0 // pred_check_branch
    %14 = sbr.rel (0) target = $region9
  $region8: #{value_network_forward.1} parent=0 // pred_region
    _
  $region9: #{value_network_forward.1} parent=0 // pred_fallthru
    _
  // Predicated region
  $region10: #{value_network_forward.1} parent=0 // pred_check
    _
  $region11: #{value_network_forward.1} parent=0 // pred_check_branch
    %16 = sbr.rel (0) target = $region13
  $region12: #{value_network_forward.1} parent=0 // pred_region
    _
  $region13: #{value_network_forward.1} parent=0 // pred_fallthru
    _
  // Predicated region
  $region14: #{value_network_forward.1} parent=0 // pred_check
    _
  $region15: #{value_network_forward.1} parent=0 // pred_check_branch
    %18 = sbr.rel (0) target = $region17
  $region16: #{value_network_forward.1} parent=0 // pred_region
    _
  $region17: #{value_network_forward.1} parent=0 // pred_fallthru
    _
  // Predicated region
  $region18: #{value_network_forward.1} parent=0 // pred_check
    _
  $region19: #{value_network_forward.1} parent=0 // pred_check_branch
    %20 = sbr.rel (0) target = $region21
  $region20: #{value_network_forward.1} parent=0 // pred_region
    _
  $region21: #{value_network_forward.1} parent=0 // pred_fallthru
    _
  %v21 = vld [vmem:[%s0] sm:$0xff]
  %v22 = vld [vmem:[%s0 + $0x8] sm:$0xff]
  %v23 = vld [vmem:[%s0 + $0x10] sm:$0xff]
  %v24 = vld [vmem:[%s0 + $0x18] sm:$0xff]
  %v25 = vld [vmem:[%s0 + $0x20] sm:$0xff]
  %v26 = vld [vmem:[%s0 + $0x28] sm:$0xff]
  %v27 = vld [vmem:[%s0 + $0x30] sm:$0xff]
  %v28 = vld [vmem:[%s0 + $0x38] sm:$0xff]
  %v29 = vld [vmem:[%s0 + $0x40] sm:$0xff]
  %v30 = vld [vmem:[%s0 + $0x48] sm:$0xff]
  %v31 = vld [vmem:[%s0 + $0x50] sm:$0xff]
  %v32 = vld [vmem:[%s0 + $0x58] sm:$0xff]
  %v33 = vld [vmem:[%s0 + $0x60] sm:$0xff]
  %v34 = vld [vmem:[%s0 + $0x68] sm:$0xff]
  %v35 = vld [vmem:[%s0 + $0x70] sm:$0xff]
  %v36 = vld [vmem:[%s0 + $0x78] sm:$0xff]
  %v37 = vld [vmem:[%s1] sm:$0xff]
  %v38 = vld [vmem:[%s1 + $0x8] sm:$0x7f]
  %v39 = vld [vmem:[%s2] sm:$0xff]
  %v40 = vld [vmem:[%s2 + $0x8] sm:$0x7f]
  %42 = vset.pattern.permute.xlu0 0
  %43 = vperm.xlu0 %42, %v39
  %v44 = vpop.permute.xlu0 %43
  %47 = vset.pattern.permute.xlu0 0
  %48 = vperm.xlu0 %47, %v40
  %v49 = vpop.permute.xlu0 %48
  %vm51 = vcmask 97280
  %v53 = vsel %vm51, %v37, 0
  %v56 = vsel %vm51, %v38, 0
  %v59 = vsel %vm51, %v21, 0
  %v62 = vsel %vm51, %v22, 0
  %v65 = vsel %vm51, %v23, 0
  %v68 = vsel %vm51, %v24, 0
  %v71 = vsel %vm51, %v25, 0
  %v74 = vsel %vm51, %v26, 0
  %v77 = vsel %vm51, %v27, 0
  %v80 = vsel %vm51, %v28, 0
  %v83 = vsel %vm51, %v29, 0
  %v86 = vsel %vm51, %v30, 0
  %v89 = vsel %vm51, %v31, 0
  %v92 = vsel %vm51, %v32, 0
  %v95 = vsel %vm51, %v33, 0
  %v98 = vsel %vm51, %v34, 0
  %v101 = vsel %vm51, %v35, 0
  %v104 = vsel %vm51, %v36, 0
  %106 = vmatpush.xpose.msra.mxu0 %v104
  %107 = vmatpush.xpose.msra.mxu0 %v101
  %108 = vmatpush.xpose.msra.mxu0 %v98
  %109 = vmatpush.xpose.msra.mxu0 %v95
  %110 = vmatpush.xpose.msra.mxu0 %v92
  %111 = vmatpush.xpose.msra.mxu0 %v89
  %112 = vmatpush.xpose.msra.mxu0 %v86
  %113 = vmatpush.xpose.msra.mxu0 %v83
  %114 = vmatpush.xpose.msra.mxu0 %v80
  %115 = vmatpush.xpose.msra.mxu0 %v77
  %116 = vmatpush.xpose.msra.mxu0 %v74
  %117 = vmatpush.xpose.msra.mxu0 %v71
  %118 = vmatpush.xpose.msra.mxu0 %v68
  %119 = vmatpush.xpose.msra.mxu0 %v65
  %120 = vmatpush.xpose.msra.mxu0 %v62
  %121 = vmatpush.xpose.msra.mxu0 %v59
  %122 = vmatmul.f32.gmra.mxu0 %v53
  %v123 = vpop.f32.mrf.mxu0
  %v124 = vadd.f32 %v44, %v123
  %125 = vmatmul.f32.gmra.mxu0 %v56
  %v126 = vpop.f32.mrf.mxu0
  %v127 = vadd.f32 %v49, %v126
  %128 = vdwg.mxu0
  %v129 = vmax.f32 %v124, 0.0
  %v130 = vmax.f32 %v127, 0.0
  %v131 = vld [vmem:[%s3] sm:$0xff]
  %v132 = vld [vmem:[%s3 + $0x8] sm:$0x7f]
  %134 = vset.pattern.permute.xlu0 0
  %135 = vperm.xlu0 %134, %v131
  %v136 = vpop.permute.xlu0 %135
  %139 = vset.pattern.permute.xlu0 0
  %140 = vperm.xlu0 %139, %v132
  %v141 = vpop.permute.xlu0 %140
  %v143 = vmul.f32 %v129, %v136
  %v144 = vmul.f32 %v130, %v141
  %vm145 = vcmask 1046528
  %v146 = vsel %vm145, %v144, 0.0
  %v147 = vadd.f32 %v143, %v146
  %v148 = vrot.slane %v147, 4
  %v149 = vadd.f32 %v147, %v148
  %v150 = vrot.slane %v149, 2
  %v151 = vadd.f32 %v149, %v150
  %v152 = vrot.slane %v151, 1
  %v153 = vadd.f32 %v151, %v152
  %s154 = sld [smem:[#allocation2]]
  %v155 = vstv %s154
  %v156 = vadd.f32 %v153, %v155
  %157 = vst [vmem:[%s5] sm:$0x1] %v156
  // Predicated region
  $region22: #{value_network_forward.1} parent=0 // pred_check
    _
  $region23: #{value_network_forward.1} parent=0 // pred_check_branch
    %159 = sbr.rel (0) target = $region25
  $region24: #{value_network_forward.1} parent=0 // pred_region
    _
  $region25: #{value_network_forward.1} parent=0 // pred_fallthru
    _
  // Predicated region
  $region26: #{value_network_forward.1} parent=0 // pred_check
    _
  $region27: #{value_network_forward.1} parent=0 // pred_check_branch
    %161 = sbr.rel (0) target = $region29
  $region28: #{value_network_forward.1} parent=0 // pred_region
    _
  $region29: #{value_network_forward.1} parent=0 // pred_fallthru
    _

</llo_original>
